<compile_context>
chip_gen: v6e
topology: v6e:2x2x1
jax: 0.10.0
libtpu: 0.0.40
codegen_flags: <defaults>
</compile_context>

<pallas_src>
import functools
import math

import jax
import jax.numpy as jnp
from jax.experimental import pallas as pl
from jax.experimental.pallas import tpu as pltpu


def _round_up(x, m):
    return ((x + m - 1) // m) * m


def _cdiv(a, b):
    return (a + b - 1) // b


# ---------------------------------------------------------------------------
# Per-generation VMEM sizing
# ---------------------------------------------------------------------------
def _vmem_physical_bytes():
    try:
        info = pltpu.get_tpu_info()
        cap = getattr(info, "vmem_capacity_bytes", None)
        if cap:
            return int(cap)
    except Exception:
        pass
    return 64 * 1024 * 1024          # conservative: v7x per-TensorCore VMEM


_VMEM_PHYSICAL = _vmem_physical_bytes()
# Scoped limit with headroom: v5e/v6e (128 MiB) -> 96 MiB, v7x (64 MiB) -> 48 MiB.
_VMEM_LIMIT_BYTES = int(min((_VMEM_PHYSICAL * 3) // 4, 96 * 1024 * 1024))
# What the tile picker is allowed to fill (double-buffered IO + f32 temporaries).
_VMEM_BUDGET_BYTES = _VMEM_LIMIT_BYTES // 2
# ~2 MiB of HBM traffic per block already hits ~85% of roofline; use ~4 MiB where VMEM allows.
_TARGET_BLOCK_BYTES = (4 * 1024 * 1024 if _VMEM_PHYSICAL >= 100 * 1024 * 1024
                       else 2 * 1024 * 1024)


def _sublane_multiple(dtype):
    itemsize = jnp.dtype(dtype).itemsize
    if itemsize >= 4:
        return 8
    if itemsize == 2:
        return 16
    return 32                         # int8 / fp8


def _pick_tile(count, io_bytes_per_unit, f32_bytes_per_unit, multiple, min_steps=4):
    """Tile size along an axis of length `count`.

    io_bytes_per_unit  : HBM bytes (input + output, IO dtype) per unit of this axis.
    f32_bytes_per_unit : bytes of in-kernel f32 temporaries per unit of this axis.
    multiple           : hardware tiling multiple for this axis.
    min_steps          : preferred minimum number of grid steps along this axis
                         (>=4 total keeps both v7x TensorCores double-buffered).
    """
    count_r = _round_up(count, multiple)
    # VMEM per unit: double-buffered IO blocks + (single-buffered) f32 temporaries.
    vmem_per_unit = 2 * io_bytes_per_unit + f32_bytes_per_unit
    cap = max(multiple, (_VMEM_BUDGET_BYTES // vmem_per_unit) // multiple * multiple)
    tgt = max(multiple,
              (_TARGET_BLOCK_BYTES // max(io_bytes_per_unit, 1)) // multiple * multiple)
    tile = min(tgt, cap, count_r)
    if min_steps > 1 and count_r >= min_steps * multiple:
        tile = min(tile, _round_up(_cdiv(count, min_steps), multiple))
    tile = max(multiple, tile)
    # Best effort: even step count so the two v7x TensorCores stay balanced.
    steps = _cdiv(count, tile)
    if steps > 1 and steps % 2 == 1:
        cand = max(multiple, _round_up(_cdiv(count, steps + 1), multiple))
        if _cdiv(count, cand) % 2 == 0:
            tile = cand
    return tile


# ---------------------------------------------------------------------------
# channels_last, lane-dense packed: block (TM, L) with L = k*C = 128.
# Per-segment sums via block-diagonal ones matmul on the (otherwise idle) MXU.
# ---------------------------------------------------------------------------
def _ln_last_packed_kernel(x_ref, w_ref, b_ref, seg_ref, o_ref, *, inv_c, eps, mm_dtype):
    x_raw = x_ref[...]                                                # (TM, L), IO dtype
    x = x_raw.astype(jnp.float32)
    seg = seg_ref[...]                                                # (L, L), mm_dtype (0/1)
    # Segment sums on the MXU; operands stay bf16 when the IO dtype is bf16.
    mean = jnp.dot(x_raw.astype(mm_dtype), seg,
                   preferred_element_type=jnp.float32) * inv_c        # (TM, L)
    xc = x - mean
    var = jnp.dot((xc * xc).astype(mm_dtype), seg,
                  preferred_element_type=jnp.float32) * inv_c         # biased variance
    inv = jax.lax.rsqrt(var + eps)
    w = w_ref[...]                                                    # (1, L) f32
    b = b_ref[...]                                                    # (1, L) f32
    o_ref[...] = (xc * inv * w + b).astype(o_ref.dtype)


# ---------------------------------------------------------------------------
# channels_last, general: block (TM, C); reduce over the lane axis.
# ---------------------------------------------------------------------------
def _ln_last_plain_kernel(x_ref, w_ref, b_ref, o_ref, *, eps):
    x = x_ref[...].astype(jnp.float32)                                # (TM, C)
    mean = jnp.mean(x, axis=-1, keepdims=True)
    xc = x - mean
    var = jnp.mean(xc * xc, axis=-1, keepdims=True)                   # biased variance
    inv = jax.lax.rsqrt(var + eps)
    o_ref[...] = (xc * inv * w_ref[...] + b_ref[...]).astype(o_ref.dtype)


def layer_norm_channels_last(x, weight, bias, eps=1e-6):
    C = x.shape[-1]
    rows = math.prod(x.shape[:-1])
    itemsize = jnp.dtype(x.dtype).itemsize
    sub_mult = _sublane_multiple(x.dtype)
    mm_dtype = jnp.bfloat16 if x.dtype == jnp.bfloat16 else jnp.float32
    compiler = pltpu.CompilerParams(
        dimension_semantics=("parallel",),
        vmem_limit_bytes=_VMEM_LIMIT_BYTES)

    if C < 128 and 128 % C == 0 and rows % (128 // C) == 0:
        # Lane-dense packing: k independent C-length segments share one 128-lane row.
        # The reshape is contiguous (no copy); per-row math is independent, so a ragged
        # tail block (clipped by Pallas) cannot contaminate valid rows.
        k = 128 // C
        L = 128
        R = rows // k
        xp = x.reshape(R, L)

        TM = _pick_tile(R,
                        io_bytes_per_unit=L * itemsize * 2,          # in + out, IO dtype
                        f32_bytes_per_unit=L * 4 * 4,                # x_f32, xc, mm LHS, mean/var
                        multiple=sub_mult)

        wp = jnp.tile(weight.astype(jnp.float32).reshape(1, C), (1, k))       # (1, L)
        bp = jnp.tile(bias.astype(jnp.float32).reshape(1, C), (1, k))         # (1, L)
        seg = jnp.kron(jnp.eye(k, dtype=jnp.float32),
                       jnp.ones((C, C), dtype=jnp.float32)).astype(mm_dtype)  # (L, L), exact 0/1

        out = pl.pallas_call(
            functools.partial(_ln_last_packed_kernel, inv_c=1.0 / C, eps=eps,
                              mm_dtype=mm_dtype),
            out_shape=jax.ShapeDtypeStruct((R, L), x.dtype),
            grid=(pl.cdiv(R, TM),),
            in_specs=[
                pl.BlockSpec((TM, L), lambda i: (i, 0)),
                pl.BlockSpec((1, L), lambda i: (0, 0)),
                pl.BlockSpec((1, L), lambda i: (0, 0)),
                pl.BlockSpec((L, L), lambda i: (0, 0)),
            ],
            out_specs=pl.BlockSpec((TM, L), lambda i: (i, 0)),
            compiler_params=compiler,
        )(xp, wp, bp, seg)
        return out.reshape(x.shape)

    # General path (large C, 128 % C != 0, or rows not packable): lane-axis reduction.
    x2 = x.reshape(rows, C)
    C_lane = _round_up(C, 128)                                        # VMEM lane padding
    TM = _pick_tile(rows,
                    io_bytes_per_unit=C_lane * itemsize * 2,
                    f32_bytes_per_unit=C_lane * 4 * 4,
                    multiple=sub_mult)
    w2 = weight.astype(jnp.float32).reshape(1, C)
    b2 = bias.astype(jnp.float32).reshape(1, C)

    out = pl.pallas_call(
        functools.partial(_ln_last_plain_kernel, eps=eps),
        out_shape=jax.ShapeDtypeStruct((rows, C), x.dtype),
        grid=(pl.cdiv(rows, TM),),
        in_specs=[
            pl.BlockSpec((TM, C), lambda i: (i, 0)),
            pl.BlockSpec((1, C), lambda i: (0, 0)),
            pl.BlockSpec((1, C), lambda i: (0, 0)),
        ],
        out_specs=pl.BlockSpec((TM, C), lambda i: (i, 0)),
        compiler_params=compiler,
    )(x2, w2, b2)
    return out.reshape(x.shape)


# ---------------------------------------------------------------------------
# channels_first: block (1, C, TS); reduce over the channel (sublane) axis.
# ---------------------------------------------------------------------------
def _ln_first_kernel(x_ref, w_ref, b_ref, o_ref, *, eps):
    x = x_ref[...].astype(jnp.float32)                                # (1, C, TS)
    mean = jnp.mean(x, axis=1, keepdims=True)                         # (1, 1, TS)
    xc = x - mean
    var = jnp.mean(xc * xc, axis=1, keepdims=True)                    # biased variance
    inv = jax.lax.rsqrt(var + eps)
    w = w_ref[...]                                                    # (1, C, 1) f32
    b = b_ref[...]
    o_ref[...] = (xc * inv * w + b).astype(o_ref.dtype)


def layer_norm_channels_first(x, weight, bias, eps=1e-6):
    # x: (N, C, *spatial); PyTorch broadcasts weight[:, None, None, None] over channel axis 1.
    N, C = x.shape[0], x.shape[1]
    S = math.prod(x.shape[2:])
    x3 = x.reshape(N, C, S)
    itemsize = jnp.dtype(x.dtype).itemsize
    c_eff = _round_up(C, _sublane_multiple(x.dtype))                  # sublane padding in VMEM

    # Want >=4 parallel steps total across (N, S-tiles); every spatial column is independent,
    # so a ragged last block along S is safe (clipped by Pallas, never written back).
    min_s_steps = max(1, _cdiv(4, N))
    TS = _pick_tile(S,
                    io_bytes_per_unit=c_eff * itemsize * 2,
                    f32_bytes_per_unit=c_eff * 4 * 4,
                    multiple=128,
                    min_steps=min_s_steps)

    w3 = weight.astype(jnp.float32).reshape(1, C, 1)
    b3 = bias.astype(jnp.float32).reshape(1, C, 1)

    out = pl.pallas_call(
        functools.partial(_ln_first_kernel, eps=eps),
        out_shape=jax.ShapeDtypeStruct((N, C, S), x.dtype),
        grid=(N, pl.cdiv(S, TS)),
        in_specs=[
            pl.BlockSpec((1, C, TS), lambda n, s: (n, 0, s)),
            pl.BlockSpec((1, C, 1), lambda n, s: (0, 0, 0)),
            pl.BlockSpec((1, C, 1), lambda n, s: (0, 0, 0)),
        ],
        out_specs=pl.BlockSpec((1, C, TS), lambda n, s: (n, 0, s)),
        compiler_params=pltpu.CompilerParams(
            dimension_semantics=("parallel", "parallel"),
            vmem_limit_bytes=_VMEM_LIMIT_BYTES),
    )(x3, w3, b3)
    return out.reshape(x.shape)


# ---------------------------------------------------------------------------
# Pure-JAX references (mirror the PyTorch module exactly)
# ---------------------------------------------------------------------------
def _ref_channels_last(x, w, b, eps):
    xf = x.astype(jnp.float32)
    mean = jnp.mean(xf, axis=-1, keepdims=True)
    var = jnp.mean((xf - mean) ** 2, axis=-1, keepdims=True)
    y = (xf - mean) / jnp.sqrt(var + eps)
    return (y * w + b).astype(x.dtype)


def _ref_channels_first(x, w, b, eps):
    xf = x.astype(jnp.float32)
    u = jnp.mean(xf, axis=1, keepdims=True)
    s = jnp.mean((xf - u) ** 2, axis=1, keepdims=True)
    y = (xf - u) / jnp.sqrt(s + eps)
    bshape = (1, -1) + (1,) * (x.ndim - 2)
    y = w.reshape(bshape) * y + b.reshape(bshape)
    return y.astype(x.dtype)


if __name__ == "__main__":
    key = jax.random.PRNGKey(0)
    eps = 1e-6  # matches the module's default eps=1e-06
    ks = jax.random.split(key, 10)

    # --- channels_last packed path: LayerNorm(32), x = (2, 16, 16, 32), f32 ---
    C_last = 32
    w_last = 1.0 + 0.1 * jax.random.normal(ks[0], (C_last,), jnp.float32)
    b_last = 0.05 * jax.random.normal(ks[1], (C_last,), jnp.float32)
    x_last = jax.random.normal(ks[2], (2, 16, 16, C_last), jnp.float32)
    y = jax.block_until_ready(layer_norm_channels_last(x_last, w_last, b_last, eps))
    assert jnp.allclose(y, _ref_channels_last(x_last, w_last, b_last, eps),
                        atol=1e-5, rtol=1e-5)

    # --- channels_last packed path, bf16 IO (exercises bf16 MXU operands) ---
    x_bf = jax.random.normal(ks[3], (2, 8, 8, C_last), jnp.float32).astype(jnp.bfloat16)
    y_bf = jax.block_until_ready(layer_norm_channels_last(x_bf, w_last, b_last, eps))
    ref_bf = _ref_channels_last(x_bf, w_last, b_last, eps)
    assert jnp.allclose(y_bf.astype(jnp.float32), ref_bf.astype(jnp.float32),
                        atol=5e-2, rtol=5e-2)

    # --- channels_last general path, ragged rows: LayerNorm(128), x = (2, 7, 9, 128) ---
    C_big = 128
    w_big = 1.0 + 0.1 * jax.random.normal(ks[4], (C_big,), jnp.float32)
    b_big = 0.05 * jax.random.normal(ks[5], (C_big,), jnp.float32)
    x_big = jax.random.normal(ks[6], (2, 7, 9, C_big), jnp.float32)
    y_big = jax.block_until_ready(layer_norm_channels_last(x_big, w_big, b_big, eps))
    assert jnp.allclose(y_big, _ref_channels_last(x_big, w_big, b_big, eps),
                        atol=1e-5, rtol=1e-5)

    # --- channels_first: LayerNorm(4, 'channels_first'), x = (2, 4, 4, 8, 8) ---
    C_first = 4
    w_first = 1.0 + 0.1 * jax.random.normal(ks[7], (C_first,), jnp.float32)
    b_first = 0.05 * jax.random.normal(ks[8], (C_first,), jnp.float32)
    x_first = jax.random.normal(ks[9], (2, C_first, 4, 8, 8), jnp.float32)
    y_f = jax.block_until_ready(layer_norm_channels_first(x_first, w_first, b_first, eps))
    assert jnp.allclose(y_f, _ref_channels_first(x_first, w_first, b_first, eps),
                        atol=1e-5, rtol=1e-5)

    # --- channels_first with a ragged spatial tail: x = (2, 4, 3, 5, 5) ---
    x_rag = jax.random.normal(ks[3], (2, C_first, 3, 5, 5), jnp.float32)
    y_rag = jax.block_until_ready(layer_norm_channels_first(x_rag, w_first, b_first, eps))
    assert jnp.allclose(y_rag, _ref_channels_first(x_rag, w_first, b_first, eps),
                        atol=1e-5, rtol=1e-5)

    print("KERNEL_OK")
</pallas_src>

<mosaic_0001>
module attributes {stable_mosaic.version = 11 : i64} {
  func.func @_ln_last_packed_kernel(%arg0: i32, %arg1: memref<32x128xf32, #tpu.memory_space<vmem>>, %arg2: memref<1x128xf32, #tpu.memory_space<vmem>>, %arg3: memref<1x128xf32, #tpu.memory_space<vmem>>, %arg4: memref<128x128xf32, #tpu.memory_space<vmem>>, %arg5: memref<32x128xf32, #tpu.memory_space<vmem>>) attributes {dimension_semantics = [#tpu.dimension_semantics<parallel>], iteration_bounds = array<i64: 4>, scalar_prefetch = 0 : i64, scratch_operands = 0 : i64, tpu.core_type = #tpu.core_type<tc>, window_params = [{transform_indices = @transform_0, window_bounds = array<i64: 32, 128>}, {pipeline_mode = #tpu.pipeline_mode<synchronous>, transform_indices = @transform_1, window_bounds = array<i64: 1, 128>}, {pipeline_mode = #tpu.pipeline_mode<synchronous>, transform_indices = @transform_2, window_bounds = array<i64: 1, 128>}, {pipeline_mode = #tpu.pipeline_mode<synchronous>, transform_indices = @transform_3, window_bounds = array<i64: 128, 128>}, {transform_indices = @transform_4, window_bounds = array<i64: 32, 128>}]} {
    %c0 = arith.constant 0 : index
    %c0_0 = arith.constant 0 : index
    %0 = vector.load %arg1[%c0, %c0_0] : memref<32x128xf32, #tpu.memory_space<vmem>>, vector<32x128xf32>
    %c0_1 = arith.constant 0 : index
    %c0_2 = arith.constant 0 : index
    %1 = vector.load %arg4[%c0_1, %c0_2] : memref<128x128xf32, #tpu.memory_space<vmem>>, vector<128x128xf32>
    %cst = arith.constant dense<0.000000e+00> : vector<32x128xf32>
    %2 = tpu.matmul %0, %1, %cst {dimension_numbers = #tpu.dot_dimension_numbers<[1], [0], [0], [1], [0, 0, 1, 1], [], []>} : vector<32x128xf32>, vector<128x128xf32>, vector<32x128xf32> -> vector<32x128xf32>
    %cst_3 = arith.constant 3.125000e-02 : f32
    %3 = vector.broadcast %cst_3 : f32 to vector<32x128xf32>
    %4 = arith.mulf %2, %3 : vector<32x128xf32>
    %5 = arith.subf %0, %4 : vector<32x128xf32>
    %6 = arith.mulf %5, %5 : vector<32x128xf32>
    %cst_4 = arith.constant dense<0.000000e+00> : vector<32x128xf32>
    %7 = tpu.matmul %6, %1, %cst_4 {dimension_numbers = #tpu.dot_dimension_numbers<[1], [0], [0], [1], [0, 0, 1, 1], [], []>} : vector<32x128xf32>, vector<128x128xf32>, vector<32x128xf32> -> vector<32x128xf32>
    %cst_5 = arith.constant 3.125000e-02 : f32
    %8 = vector.broadcast %cst_5 : f32 to vector<32x128xf32>
    %9 = arith.mulf %7, %8 : vector<32x128xf32>
    %cst_6 = arith.constant 9.99999997E-7 : f32
    %10 = vector.broadcast %cst_6 : f32 to vector<32x128xf32>
    %11 = arith.addf %9, %10 : vector<32x128xf32>
    %12 = math.rsqrt %11 : vector<32x128xf32>
    %c0_7 = arith.constant 0 : index
    %c0_8 = arith.constant 0 : index
    %13 = vector.load %arg2[%c0_7, %c0_8] : memref<1x128xf32, #tpu.memory_space<vmem>>, vector<1x128xf32>
    %c0_9 = arith.constant 0 : index
    %c0_10 = arith.constant 0 : index
    %14 = vector.load %arg3[%c0_9, %c0_10] : memref<1x128xf32, #tpu.memory_space<vmem>>, vector<1x128xf32>
    %15 = arith.mulf %5, %12 : vector<32x128xf32>
    %16 = vector.broadcast %13 : vector<1x128xf32> to vector<32x128xf32>
    %17 = arith.mulf %15, %16 : vector<32x128xf32>
    %18 = vector.broadcast %14 : vector<1x128xf32> to vector<32x128xf32>
    %19 = arith.addf %17, %18 : vector<32x128xf32>
    %c0_11 = arith.constant 0 : index
    %c0_12 = arith.constant 0 : index
    %20 = vector.load %arg5[%c0_11, %c0_12] : memref<32x128xf32, #tpu.memory_space<vmem>>, vector<32x128xf32>
    tpu.vector_store %arg5[%c0_11, %c0_12], %19 {strides = array<i32>} : memref<32x128xf32, #tpu.memory_space<vmem>>, vector<32x128xf32>,
    return
  }
  func.func @transform_0(%arg0: i32) -> (i32, i32) {
    %c0_i32 = arith.constant 0 : i32
    %c0_i32_0 = arith.constant 0 : i32
    return %arg0, %c0_i32 : i32, i32
  }
  func.func @transform_1(%arg0: i32) -> (i32, i32) {
    %c0_i32 = arith.constant 0 : i32
    %c0_i32_0 = arith.constant 0 : i32
    %c0_i32_1 = arith.constant 0 : i32
    return %c0_i32, %c0_i32_0 : i32, i32
  }
  func.func @transform_2(%arg0: i32) -> (i32, i32) {
    %c0_i32 = arith.constant 0 : i32
    %c0_i32_0 = arith.constant 0 : i32
    %c0_i32_1 = arith.constant 0 : i32
    return %c0_i32, %c0_i32_0 : i32, i32
  }
  func.func @transform_3(%arg0: i32) -> (i32, i32) {
    %c0_i32 = arith.constant 0 : i32
    %c0_i32_0 = arith.constant 0 : i32
    %c0_i32_1 = arith.constant 0 : i32
    return %c0_i32, %c0_i32_0 : i32, i32
  }
  func.func @transform_4(%arg0: i32) -> (i32, i32) {
    %c0_i32 = arith.constant 0 : i32
    %c0_i32_0 = arith.constant 0 : i32
    return %arg0, %c0_i32 : i32, i32
  }
}

</mosaic_0001>

<llo_original>
// kernel: tpu_custom_call.1
$region0: #{tpu_custom_call.1}
  #allocation0 [shape = 'u32[]', space=smem, size = 0x4, offset = 0x4, fixed_abs, tag = 'smem constant byte address 0x4 - core index']
  #allocation1 [shape = 'u32[144,128]{1,0:T(1,128)}', space=vmem, size = 0x12000, scoped, tag = 'internal scratch']
  %s0 = inlined_call_operand.hbm [shape: f32[128,128], index: 0, kind: input, shape index: {}]
  %s1 = inlined_call_operand.vmem [shape: f32[1,128], index: 1, kind: input, shape index: {}]
  %s2 = inlined_call_operand.vmem [shape: f32[1,128], index: 2, kind: input, shape index: {}]
  %s3 = inlined_call_operand.hbm [shape: f32[128,128], index: 3, kind: input, shape index: {}]
  %s4 = inlined_call_operand.hbm [shape: f32[128,128], index: 4, kind: output, shape index: {}]
  %s5 = sld [smem:[#allocation0]]
  $region57: #{tpu_custom_call.1} parent=0
    _
  %s7 = ssub.s32 1, %s5
  %s8 = scalar_select 0, %s7, %s5
  $region1: #{tpu_custom_call.1} parent=0
    #allocation2 [shape = 'u8[32768]{0}', space=vmem, size = 0x8000, scoped, tag = 'input window, operand 0']
    #allocation3 [shape = 's32[2]{0}', space=sflag, size = 0x8, scoped, tag = 'scoped memory for tpu_custom_call.1']
    #allocation4 [shape = 's32[2]{0}', space=sflag, size = 0x8, scoped, tag = 'scoped memory for tpu_custom_call.1']
    #allocation5 [shape = 'u8[65536]{0}', space=vmem, size = 0x10000, scoped, tag = 'input window, operand 3, single buffered']
    #allocation6 [shape = 's32[1]{0}', space=sflag, size = 0x4, scoped, tag = 'scoped memory for tpu_custom_call.1']
    #allocation7 [shape = 'u8[32768]{0}', space=vmem, size = 0x8000, scoped, tag = 'output window, operand 0']
    %9 = vsyncpa [#allocation3], 0
    %s10 = scalar_lea.sflag [#allocation3], 1
    %11 = vsyncpa %s10, 0
    %12 = vsyncpa [#allocation6], 0
    %13 = vsyncpa [#allocation4], 0
    %s14 = scalar_lea.sflag [#allocation4], 1
    %15 = vsyncpa %s14, 0
    loop: start=0, step=1, limit=6
    $region2: #{tpu_custom_call.1} parent=1 // loop_pre_header
      _
    $region3: #{tpu_custom_call.1} parent=1 // loop_header
      %s17 = sphi 0, %s21
      %p18 = scmp.ge.s32.totalorder %s17, 6
      %s27 = sphi 0, %s29
      %s30 = sphi 0, %s27
      %s31 = sphi 0, %s30
      %s47 = sphi 0, %s31
      %s51 = sphi 0, %s51
      %s53 = sphi 0, %s51
      %s54 = sphi 0, %s53
      %s68 = sphi 0, %s54
      %s72 = sphi 0, %s72
      %s74 = sphi 0, %s72
      %s75 = sphi 0, %s74
      %s89 = sphi 0, %s75
      %s93 = sphi 0, %s93
      %s95 = sphi 0, %s93
      %s96 = sphi 0, %s95
      %s110 = sphi 0, %s96
      %s116 = sphi 0, %s118
      %s119 = sphi 0, %s116
      %s120 = sphi 0, %s119
      %s136 = sphi 0, %s120
    $region4: #{tpu_custom_call.1} parent=1 // loop_header_branch
      %20 = sbr.rel (%p18) target = $region8
    $region5: #{tpu_custom_call.1} parent=1 // loop_body
      %s22 = ssub.s32 %s17, 1
      %s23 = ssub.s32 %s17, 2
      %s24 = sadd.s32 %s17, 1
      %s25 = ssub.s32 %s17, %s24
      %p26 = scmp.eq.s32.totalorder %s25, 0
      %s28 = sadd.s32 %s27, 1
      %s29 = scalar_select %p26, %s27, %s28
      %p32 = pneg %p26
      %p33 = scmp.eq.s32.totalorder %s17, 3
      %p34 = por %p32, %p33
      %p35 = scmp.ne.s32.totalorder %s27, %s30
      %p36 = scmp.eq.s32.totalorder %s17, 0
      %p37 = por %p35, %p36
      %p38 = scmp.ne.s32.totalorder %s27, %s30
      %p39 = scmp.eq.s32.totalorder %s22, 3
      %p40 = por %p38, %p39
      %p41 = scmp.ne.s32.totalorder %s30, %s31
      %p42 = scmp.eq.s32.totalorder %s22, 0
      %p43 = por %p41, %p42
      %p44 = scmp.ne.s32.totalorder %s30, %s31
      %p45 = scmp.eq.s32.totalorder %s23, 3
      %p46 = por %p44, %p45
      %p48 = scmp.ne.s32.totalorder %s31, %s47
      %p49 = scmp.eq.s32.totalorder %s23, 0
      %p50 = por %p48, %p49
      %s52 = sadd.s32 %s51, 1
      %p55 = scmp.eq.s32.totalorder %s17, 3
      %p56 = scmp.ne.s32.totalorder %s51, %s53
      %p57 = scmp.eq.s32.totalorder %s17, 0
      %p58 = por %p56, %p57
      %p59 = scmp.ne.s32.totalorder %s51, %s53
      %p60 = scmp.eq.s32.totalorder %s22, 3
      %p61 = por %p59, %p60
      %p62 = scmp.ne.s32.totalorder %s53, %s54
      %p63 = scmp.eq.s32.totalorder %s22, 0
      %p64 = por %p62, %p63
      %p65 = scmp.ne.s32.totalorder %s53, %s54
      %p66 = scmp.eq.s32.totalorder %s23, 3
      %p67 = por %p65, %p66
      %p69 = scmp.ne.s32.totalorder %s54, %s68
      %p70 = scmp.eq.s32.totalorder %s23, 0
      %p71 = por %p69, %p70
      %s73 = sadd.s32 %s72, 1
      %p76 = scmp.eq.s32.totalorder %s17, 3
      %p77 = scmp.ne.s32.totalorder %s72, %s74
      %p78 = scmp.eq.s32.totalorder %s17, 0
      %p79 = por %p77, %p78
      %p80 = scmp.ne.s32.totalorder %s72, %s74
      %p81 = scmp.eq.s32.totalorder %s22, 3
      %p82 = por %p80, %p81
      %p83 = scmp.ne.s32.totalorder %s74, %s75
      %p84 = scmp.eq.s32.totalorder %s22, 0
      %p85 = por %p83, %p84
      %p86 = scmp.ne.s32.totalorder %s74, %s75
      %p87 = scmp.eq.s32.totalorder %s23, 3
      %p88 = por %p86, %p87
      %p90 = scmp.ne.s32.totalorder %s75, %s89
      %p91 = scmp.eq.s32.totalorder %s23, 0
      %p92 = por %p90, %p91
      %s94 = sadd.s32 %s93, 1
      %p97 = scmp.eq.s32.totalorder %s17, 3
      %p98 = scmp.ne.s32.totalorder %s93, %s95
      %p99 = scmp.eq.s32.totalorder %s17, 0
      %p100 = por %p98, %p99
      %p101 = scmp.ne.s32.totalorder %s93, %s95
      %p102 = scmp.eq.s32.totalorder %s22, 3
      %p103 = por %p101, %p102
      %p104 = scmp.ne.s32.totalorder %s95, %s96
      %p105 = scmp.eq.s32.totalorder %s22, 0
      %p106 = por %p104, %p105
      %p107 = scmp.ne.s32.totalorder %s95, %s96
      %p108 = scmp.eq.s32.totalorder %s23, 3
      %p109 = por %p107, %p108
      %p111 = scmp.ne.s32.totalorder %s96, %s110
      %p112 = scmp.eq.s32.totalorder %s23, 0
      %p113 = por %p111, %p112
      %s114 = ssub.s32 %s17, %s24
      %p115 = scmp.eq.s32.totalorder %s114, 0
      %s117 = sadd.s32 %s116, 1
      %s118 = scalar_select %p115, %s116, %s117
      %p121 = pneg %p115
      %p122 = scmp.eq.s32.totalorder %s17, 3
      %p123 = por %p121, %p122
      %p124 = scmp.ne.s32.totalorder %s116, %s119
      %p125 = scmp.eq.s32.totalorder %s17, 0
      %p126 = por %p124, %p125
      %p127 = scmp.ne.s32.totalorder %s116, %s119
      %p128 = scmp.eq.s32.totalorder %s22, 3
      %p129 = por %p127, %p128
      %p130 = scmp.ne.s32.totalorder %s119, %s120
      %p131 = scmp.eq.s32.totalorder %s22, 0
      %p132 = por %p130, %p131
      %p133 = scmp.ne.s32.totalorder %s119, %s120
      %p134 = scmp.eq.s32.totalorder %s23, 3
      %p135 = por %p133, %p134
      %p137 = scmp.ne.s32.totalorder %s120, %s136
      %p138 = scmp.eq.s32.totalorder %s23, 0
      %p139 = por %p137, %p138
      %p140 = scmp.le.s32.totalorder 1, %s17
      %p141 = scmp.lt.s32.totalorder %s17, 5
      %p142 = pnand %p140, %p141
      %p143 = pneg %p142
      // Predicated region
      $region9: #{tpu_custom_call.1} parent=5 // pred_check
        _
      $region10: #{tpu_custom_call.1} parent=5 // pred_check_branch
        %145 = sbr.rel (%p142) target = $region12
      $region11: #{tpu_custom_call.1} parent=5 // pred_region
        %s146 = ssub.s32 %s17, 1
        // Predicated region
        $region13: #{tpu_custom_call.1} parent=11 // pred_check
          %p147 = pneg %p64
        $region14: #{tpu_custom_call.1} parent=11 // pred_check_branch
          %149 = sbr.rel (%p147) target = $region16
        $region15: #{tpu_custom_call.1} parent=11 // pred_region
          _
        $region16: #{tpu_custom_call.1} parent=11 // pred_fallthru
          _
        // Predicated region
        $region17: #{tpu_custom_call.1} parent=11 // pred_check
          %p150 = pneg %p85
        $region18: #{tpu_custom_call.1} parent=11 // pred_check_branch
          %152 = sbr.rel (%p150) target = $region20
        $region19: #{tpu_custom_call.1} parent=11 // pred_region
          _
        $region20: #{tpu_custom_call.1} parent=11 // pred_fallthru
          _
        // Predicated region
        $region21: #{tpu_custom_call.1} parent=11 // pred_check
          %p153 = pneg %p106
        $region22: #{tpu_custom_call.1} parent=11 // pred_check_branch
          %155 = sbr.rel (%p153) target = $region24
        $region23: #{tpu_custom_call.1} parent=11 // pred_region
          %s157 = ssub.s32 2048, 2048
          %158 = vsyncadd [#allocation6], %s157
          %s159 = sshll.u32 [#allocation5], 4
          %s160 = int_to_ptr.vmem [resolvable:$true] %s159
          %165 = dma.hbm_to_vmem [thread:$0]  %s3, 2048, %s160, [#allocation6], 128, 128, 8
        $region24: #{tpu_custom_call.1} parent=11 // pred_fallthru
          _
      $region12: #{tpu_custom_call.1} parent=5 // pred_fallthru
        _
      %p166 = scmp.lt.s32.totalorder %s17, 4
      // Predicated region
      $region25: #{tpu_custom_call.1} parent=5 // pred_check
        %p167 = pneg %p166
      $region26: #{tpu_custom_call.1} parent=5 // pred_check_branch
        %169 = sbr.rel (%p167) target = $region28
      $region27: #{tpu_custom_call.1} parent=5 // pred_region
        // Predicated region
        $region29: #{tpu_custom_call.1} parent=27 // pred_check
          %p170 = pneg %p37
        $region30: #{tpu_custom_call.1} parent=27 // pred_check_branch
          %172 = sbr.rel (%p170) target = $region32
        $region31: #{tpu_custom_call.1} parent=27 // pred_region
          %s173 = sand.u32 %s27, 1
          %s174 = scalar_lea.sflag [#allocation3], %s173
          %s175 = sand.u32 %s27, 1
          %s176 = smul.addr %s175, 32
          %s177 = scalar_lea.vmem [#allocation2], %s176
          %s178 = smul.u32 4, %s17
          %s180 = ssub.s32 512, 512
          %181 = vsyncadd %s174, %s180
          %s182 = smul.addr %s178, 128
          %s183 = scalar_lea.hbm %s0, %s182
          %s184 = sshll.u32 %s177, 4
          %s185 = int_to_ptr.vmem [resolvable:$true] %s184
          %190 = dma.hbm_to_vmem [thread:$0]  %s183, 512, %s185, %s174, 128, 128, 8
        $region32: #{tpu_custom_call.1} parent=27 // pred_fallthru
          _
      $region28: #{tpu_custom_call.1} parent=5 // pred_fallthru
        _
      %p191 = scmp.le.s32.totalorder 1, %s17
      %p192 = scmp.lt.s32.totalorder %s17, 5
      %p193 = pnand %p191, %p192
      %p194 = pneg %p193
      // Predicated region
      $region33: #{tpu_custom_call.1} parent=5 // pred_check
        _
      $region34: #{tpu_custom_call.1} parent=5 // pred_check_branch
        %196 = sbr.rel (%p193) target = $region36
      $region35: #{tpu_custom_call.1} parent=5 // pred_region
        %s197 = ssub.s32 %s17, 1
        %s198 = sand.u32 %s30, 1
        %s199 = scalar_lea.sflag [#allocation3], %s198
        %s200 = sand.u32 %s30, 1
        %s201 = smul.addr %s200, 32
        %s202 = scalar_lea.vmem [#allocation2], %s201
        // Predicated region
        $region37: #{tpu_custom_call.1} parent=35 // pred_check
          %p203 = pneg %p43
        $region38: #{tpu_custom_call.1} parent=35 // pred_check_branch
          %205 = sbr.rel (%p203) target = $region40
        $region39: #{tpu_custom_call.1} parent=35 // pred_region
          %206 = dma.done %s199, 512
        $region40: #{tpu_custom_call.1} parent=35 // pred_fallthru
          _
        // Predicated region
        $region41: #{tpu_custom_call.1} parent=35 // pred_check
          %p207 = pneg %p106
        $region42: #{tpu_custom_call.1} parent=35 // pred_check_branch
          %209 = sbr.rel (%p207) target = $region44
        $region43: #{tpu_custom_call.1} parent=35 // pred_region
          %210 = dma.done [#allocation6], 2048
        $region44: #{tpu_custom_call.1} parent=35 // pred_fallthru
          _
        %s211 = sand.u32 %s30, 1
        %s212 = scalar_lea.sflag [#allocation3], %s211
        %s213 = sand.u32 %s30, 1
        %s214 = smul.addr %s213, 32
        %s215 = scalar_lea.vmem [#allocation2], %s214
        %p216 = pneg %p43
        %p217 = pneg %p40
        %p218 = pneg %p64
        %p219 = pneg %p61
        %p220 = pneg %p85
        %p221 = pneg %p82
        %p222 = pneg %p106
        %p223 = pneg %p103
        %p224 = pneg %p132
        %p225 = pneg %p129
        %s226 = sand.u32 %s119, 1
        %s227 = scalar_lea.sflag [#allocation4], %s226
        %s228 = sand.u32 %s119, 1
        %s229 = smul.addr %s228, 32
        %s230 = scalar_lea.vmem [#allocation7], %s229
        %s231 = smul.u32 4, %s22
        %s232 = smul.u32 4, %s22
        %v233 = vld [vmem:[%s202] sm:$0xff]
        %v234 = vld [vmem:[%s202 + $0x8] sm:$0xff]
        %v235 = vld [vmem:[%s202 + $0x10] sm:$0xff]
        %v236 = vld [vmem:[%s202 + $0x18] sm:$0xff]
        %v237 = vld [vmem:[#allocation5] sm:$0xff]
        %v238 = vld [vmem:[#allocation5 + $0x8] sm:$0xff]
        %v239 = vld [vmem:[#allocation5 + $0x10] sm:$0xff]
        %v240 = vld [vmem:[#allocation5 + $0x18] sm:$0xff]
        %v241 = vld [vmem:[#allocation5 + $0x20] sm:$0xff]
        %v242 = vld [vmem:[#allocation5 + $0x28] sm:$0xff]
        %v243 = vld [vmem:[#allocation5 + $0x30] sm:$0xff]
        %v244 = vld [vmem:[#allocation5 + $0x38] sm:$0xff]
        %v245 = vld [vmem:[#allocation5 + $0x40] sm:$0xff]
        %v246 = vld [vmem:[#allocation5 + $0x48] sm:$0xff]
        %v247 = vld [vmem:[#allocation5 + $0x50] sm:$0xff]
        %v248 = vld [vmem:[#allocation5 + $0x58] sm:$0xff]
        %v249 = vld [vmem:[#allocation5 + $0x60] sm:$0xff]
        %v250 = vld [vmem:[#allocation5 + $0x68] sm:$0xff]
        %v251 = vld [vmem:[#allocation5 + $0x70] sm:$0xff]
        %v252 = vld [vmem:[#allocation5 + $0x78] sm:$0xff]
        %253 = vmatprep.subr.mxu0 0.0
        %254 = vmatpush1.msra.mxu0 %v252
        %255 = vmatprep.subr.mxu0 0.0
        %256 = vmatpush1.msra.mxu0 %v251
        %257 = vmatprep.subr.mxu0 0.0
        %258 = vmatpush1.msra.mxu0 %v250
        %259 = vmatprep.subr.mxu0 0.0
        %260 = vmatpush1.msra.mxu0 %v249
        %261 = vmatprep.subr.mxu0 0.0
        %262 = vmatpush1.msra.mxu0 %v248
        %263 = vmatprep.subr.mxu0 0.0
        %264 = vmatpush1.msra.mxu0 %v247
        %265 = vmatprep.subr.mxu0 0.0
        %266 = vmatpush1.msra.mxu0 %v246
        %267 = vmatprep.subr.mxu0 0.0
        %268 = vmatpush1.msra.mxu0 %v245
        %269 = vmatprep.subr.mxu0 0.0
        %270 = vmatpush1.msra.mxu0 %v244
        %271 = vmatprep.subr.mxu0 0.0
        %272 = vmatpush1.msra.mxu0 %v243
        %273 = vmatprep.subr.mxu0 0.0
        %274 = vmatpush1.msra.mxu0 %v242
        %275 = vmatprep.subr.mxu0 0.0
        %276 = vmatpush1.msra.mxu0 %v241
        %277 = vmatprep.subr.mxu0 0.0
        %278 = vmatpush1.msra.mxu0 %v240
        %279 = vmatprep.subr.mxu0 0.0
        %280 = vmatpush1.msra.mxu0 %v239
        %281 = vmatprep.subr.mxu0 0.0
        %282 = vmatpush1.msra.mxu0 %v238
        %283 = vmatprep.subr.mxu0 0.0
        %284 = vmatpush1.msra.mxu0 %v237
        %285 = vmatprep.subr.mxu0 0.0
        %286 = vmatpush2.msra.mxu0 0.0
        %287 = vmatprep.subr.mxu0 0.0
        %288 = vmatpush2.msra.mxu0 0.0
        %289 = vmatprep.subr.mxu0 0.0
        %290 = vmatpush2.msra.mxu0 0.0
        %291 = vmatprep.subr.mxu0 0.0
        %292 = vmatpush2.msra.mxu0 0.0
        %293 = vmatprep.subr.mxu0 0.0
        %294 = vmatpush2.msra.mxu0 0.0
        %295 = vmatprep.subr.mxu0 0.0
        %296 = vmatpush2.msra.mxu0 0.0
        %297 = vmatprep.subr.mxu0 0.0
        %298 = vmatpush2.msra.mxu0 0.0
        %299 = vmatprep.subr.mxu0 0.0
        %300 = vmatpush2.msra.mxu0 0.0
        %301 = vmatprep.subr.mxu0 0.0
        %302 = vmatpush2.msra.mxu0 0.0
        %303 = vmatprep.subr.mxu0 0.0
        %304 = vmatpush2.msra.mxu0 0.0
        %305 = vmatprep.subr.mxu0 0.0
        %306 = vmatpush2.msra.mxu0 0.0
        %307 = vmatprep.subr.mxu0 0.0
        %308 = vmatpush2.msra.mxu0 0.0
        %309 = vmatprep.subr.mxu0 0.0
        %310 = vmatpush2.msra.mxu0 0.0
        %311 = vmatprep.subr.mxu0 0.0
        %312 = vmatpush2.msra.mxu0 0.0
        %313 = vmatprep.subr.mxu0 0.0
        %314 = vmatpush2.msra.mxu0 0.0
        %315 = vmatprep.subr.mxu0 0.0
        %316 = vmatpush2.msra.mxu0 0.0
        %317 = vmatprep.mubr.f32.mxu0 0.0
        %318 = vmatmul.mubr.f32.gmra.mxu0 %v233
        %v319 = vpop.f32.mrf.mxu0
        %v320 = vadd.f32 0.0, %v319
        %v321 = vpop.f32.mrf.mxu0
        %322 = vmatprep.mubr.f32.mxu0 0.0
        %323 = vmatmul.mubr.f32.gmra.mxu0 %v234
        %v324 = vpop.f32.mrf.mxu0
        %v325 = vadd.f32 0.0, %v324
        %v326 = vpop.f32.mrf.mxu0
        %327 = vmatprep.mubr.f32.mxu0 0.0
        %328 = vmatmul.mubr.f32.gmra.mxu0 %v235
        %v329 = vpop.f32.mrf.mxu0
        %v330 = vadd.f32 0.0, %v329
        %v331 = vpop.f32.mrf.mxu0
        %332 = vmatprep.mubr.f32.mxu0 0.0
        %333 = vmatmul.mubr.f32.gmra.mxu0 %v236
        %v334 = vpop.f32.mrf.mxu0
        %v335 = vadd.f32 0.0, %v334
        %v336 = vpop.f32.mrf.mxu0
        %337 = vdwg.mxu0
        %v338 = vmul.f32 %v320, 0.03125
        %v339 = vmul.f32 %v325, 0.03125
        %v340 = vmul.f32 %v330, 0.03125
        %v341 = vmul.f32 %v335, 0.03125
        %v342 = vsub.f32 %v233, %v338
        %v343 = vsub.f32 %v234, %v339
        %v344 = vsub.f32 %v235, %v340
        %v345 = vsub.f32 %v236, %v341
        %v346 = vmul.f32 %v342, %v342
        %v347 = vmul.f32 %v343, %v343
        %v348 = vmul.f32 %v344, %v344
        %v349 = vmul.f32 %v345, %v345
        %350 = vmatprep.subr.mxu0 0.0
        %351 = vmatpush1.msra.mxu0 %v252
        %352 = vmatprep.subr.mxu0 0.0
        %353 = vmatpush1.msra.mxu0 %v251
        %354 = vmatprep.subr.mxu0 0.0
        %355 = vmatpush1.msra.mxu0 %v250
        %356 = vmatprep.subr.mxu0 0.0
        %357 = vmatpush1.msra.mxu0 %v249
        %358 = vmatprep.subr.mxu0 0.0
        %359 = vmatpush1.msra.mxu0 %v248
        %360 = vmatprep.subr.mxu0 0.0
        %361 = vmatpush1.msra.mxu0 %v247
        %362 = vmatprep.subr.mxu0 0.0
        %363 = vmatpush1.msra.mxu0 %v246
        %364 = vmatprep.subr.mxu0 0.0
        %365 = vmatpush1.msra.mxu0 %v245
        %366 = vmatprep.subr.mxu0 0.0
        %367 = vmatpush1.msra.mxu0 %v244
        %368 = vmatprep.subr.mxu0 0.0
        %369 = vmatpush1.msra.mxu0 %v243
        %370 = vmatprep.subr.mxu0 0.0
        %371 = vmatpush1.msra.mxu0 %v242
        %372 = vmatprep.subr.mxu0 0.0
        %373 = vmatpush1.msra.mxu0 %v241
        %374 = vmatprep.subr.mxu0 0.0
        %375 = vmatpush1.msra.mxu0 %v240
        %376 = vmatprep.subr.mxu0 0.0
        %377 = vmatpush1.msra.mxu0 %v239
        %378 = vmatprep.subr.mxu0 0.0
        %379 = vmatpush1.msra.mxu0 %v238
        %380 = vmatprep.subr.mxu0 0.0
        %381 = vmatpush1.msra.mxu0 %v237
        %382 = vmatprep.subr.mxu0 0.0
        %383 = vmatpush2.msra.mxu0 0.0
        %384 = vmatprep.subr.mxu0 0.0
        %385 = vmatpush2.msra.mxu0 0.0
        %386 = vmatprep.subr.mxu0 0.0
        %387 = vmatpush2.msra.mxu0 0.0
        %388 = vmatprep.subr.mxu0 0.0
        %389 = vmatpush2.msra.mxu0 0.0
        %390 = vmatprep.subr.mxu0 0.0
        %391 = vmatpush2.msra.mxu0 0.0
        %392 = vmatprep.subr.mxu0 0.0
        %393 = vmatpush2.msra.mxu0 0.0
        %394 = vmatprep.subr.mxu0 0.0
        %395 = vmatpush2.msra.mxu0 0.0
        %396 = vmatprep.subr.mxu0 0.0
        %397 = vmatpush2.msra.mxu0 0.0
        %398 = vmatprep.subr.mxu0 0.0
        %399 = vmatpush2.msra.mxu0 0.0
        %400 = vmatprep.subr.mxu0 0.0
        %401 = vmatpush2.msra.mxu0 0.0
        %402 = vmatprep.subr.mxu0 0.0
        %403 = vmatpush2.msra.mxu0 0.0
        %404 = vmatprep.subr.mxu0 0.0
        %405 = vmatpush2.msra.mxu0 0.0
        %406 = vmatprep.subr.mxu0 0.0
        %407 = vmatpush2.msra.mxu0 0.0
        %408 = vmatprep.subr.mxu0 0.0
        %409 = vmatpush2.msra.mxu0 0.0
        %410 = vmatprep.subr.mxu0 0.0
        %411 = vmatpush2.msra.mxu0 0.0
        %412 = vmatprep.subr.mxu0 0.0
        %413 = vmatpush2.msra.mxu0 0.0
        %414 = vmatprep.mubr.f32.mxu0 0.0
        %415 = vmatmul.mubr.f32.gmra.mxu0 %v346
        %v416 = vpop.f32.mrf.mxu0
        %v417 = vadd.f32 0.0, %v416
        %v418 = vpop.f32.mrf.mxu0
        %419 = vmatprep.mubr.f32.mxu0 0.0
        %420 = vmatmul.mubr.f32.gmra.mxu0 %v347
        %v421 = vpop.f32.mrf.mxu0
        %v422 = vadd.f32 0.0, %v421
        %v423 = vpop.f32.mrf.mxu0
        %424 = vmatprep.mubr.f32.mxu0 0.0
        %425 = vmatmul.mubr.f32.gmra.mxu0 %v348
        %v426 = vpop.f32.mrf.mxu0
        %v427 = vadd.f32 0.0, %v426
        %v428 = vpop.f32.mrf.mxu0
        %429 = vmatprep.mubr.f32.mxu0 0.0
        %430 = vmatmul.mubr.f32.gmra.mxu0 %v349
        %v431 = vpop.f32.mrf.mxu0
        %v432 = vadd.f32 0.0, %v431
        %v433 = vpop.f32.mrf.mxu0
        %434 = vdwg.mxu0
        %v435 = vmul.f32 %v417, 0.03125
        %v436 = vmul.f32 %v422, 0.03125
        %v437 = vmul.f32 %v427, 0.03125
        %v438 = vmul.f32 %v432, 0.03125
        %v439 = vadd.f32 %v435, 1e-06
        %v440 = vadd.f32 %v436, 1e-06
        %v441 = vadd.f32 %v437, 1e-06
        %v442 = vadd.f32 %v438, 1e-06
        %v443 = vrsqrt.pop %v439
        %v444 = vrsqrt.pop %v440
        %v445 = vrsqrt.pop %v441
        %v446 = vrsqrt.pop %v442
        %v447 = vld [vmem:[%s1] sm:$0x1]
        %v448 = vld [vmem:[%s2] sm:$0x1]
        %v449 = vmul.f32 %v342, %v443
        %v450 = vmul.f32 %v343, %v444
        %v451 = vmul.f32 %v344, %v445
        %v452 = vmul.f32 %v345, %v446
        %v454 = vlaneseq
        %v455 = vshrl.u32 %v454, 7
        %v456 = vsub.s32 0, %v455
        %v457 = vrot.slane %v447, %v456
        %v459 = vmul.f32 %v449, %v457
        %v460 = vmul.f32 %v450, %v457
        %v461 = vmul.f32 %v451, %v457
        %v462 = vmul.f32 %v452, %v457
        %v464 = vlaneseq
        %v465 = vshrl.u32 %v464, 7
        %v466 = vsub.s32 0, %v465
        %v467 = vrot.slane %v448, %v466
        %v469 = vadd.f32 %v459, %v467
        %v470 = vadd.f32 %v460, %v467
        %v471 = vadd.f32 %v461, %v467
        %v472 = vadd.f32 %v462, %v467
        %473 = vst [vmem:[%s230] sm:$0xff] %v469
        %474 = vst [vmem:[%s230 + $0x8] sm:$0xff] %v470
        %475 = vst [vmem:[%s230 + $0x10] sm:$0xff] %v471
        %476 = vst [vmem:[%s230 + $0x18] sm:$0xff] %v472
        %s477 = sand.u32 %s119, 1
        %s478 = scalar_lea.sflag [#allocation4], %s477
        %s479 = sand.u32 %s119, 1
        %s480 = smul.addr %s479, 32
        %s481 = scalar_lea.vmem [#allocation7], %s480
        // Predicated region
        $region45: #{tpu_custom_call.1} parent=35 // pred_check
          %p482 = pneg %p129
        $region46: #{tpu_custom_call.1} parent=35 // pred_check_branch
          %484 = sbr.rel (%p482) target = $region48
        $region47: #{tpu_custom_call.1} parent=35 // pred_region
          %s485 = smul.u32 4, %s22
          %s487 = ssub.s32 512, 512
          %488 = vsyncadd %s478, %s487
          %s489 = smul.addr %s485, 128
          %s490 = scalar_lea.hbm %s4, %s489
          %s491 = sshll.u32 %s481, 4
          %s492 = int_to_ptr.vmem [resolvable:$true] %s491
          %497 = dma.vmem_to_hbm [thread:$0]  %s492, 512, %s490, %s478, 128, 128, 8
        $region48: #{tpu_custom_call.1} parent=35 // pred_fallthru
          _
      $region36: #{tpu_custom_call.1} parent=5 // pred_fallthru
        _
      %p498 = scmp.le.s32.totalorder 2, %s17
      // Predicated region
      $region49: #{tpu_custom_call.1} parent=5 // pred_check
        %p499 = pneg %p498
      $region50: #{tpu_custom_call.1} parent=5 // pred_check_branch
        %501 = sbr.rel (%p499) target = $region52
      $region51: #{tpu_custom_call.1} parent=5 // pred_region
        %s502 = ssub.s32 %s17, 2
        // Predicated region
        $region53: #{tpu_custom_call.1} parent=51 // pred_check
          %p503 = pneg %p135
        $region54: #{tpu_custom_call.1} parent=51 // pred_check_branch
          %505 = sbr.rel (%p503) target = $region56
        $region55: #{tpu_custom_call.1} parent=51 // pred_region
          %s506 = sand.u32 %s120, 1
          %s507 = scalar_lea.sflag [#allocation4], %s506
          %s508 = sand.u32 %s120, 1
          %s509 = smul.addr %s508, 32
          %s510 = scalar_lea.vmem [#allocation7], %s509
          %511 = dma.done %s507, 512
        $region56: #{tpu_custom_call.1} parent=51 // pred_fallthru
          _
      $region52: #{tpu_custom_call.1} parent=5 // pred_fallthru
        _
    $region6: #{tpu_custom_call.1} parent=1 // loop_footer
      %s21 = sadd.s32 1, %s17
    $region7: #{tpu_custom_call.1} parent=1 // loop_footer_branch
      %16 = sbr.rel target = $region3
    $region8: #{tpu_custom_call.1} parent=1 // loop_exit
      _
    %512 = vsyncpa [#allocation3], 1
    %s513 = scalar_lea.sflag [#allocation3], 1
    %514 = vsyncpa %s513, 1
    %515 = vsyncpa [#allocation6], 1
    %516 = vsyncpa [#allocation4], 1
    %s517 = scalar_lea.sflag [#allocation4], 1
    %518 = vsyncpa %s517, 1

</llo_original>
